<compile_context>
chip_gen: v5e
topology: v5e:2x2
jax: 0.10.0
libtpu: 0.0.40
codegen_flags: <defaults>
</compile_context>

<pallas_src>
import jax
import jax.numpy as jnp
from jax.experimental import pallas as pl
from jax.experimental.pallas import tpu as pltpu

NEG_INF = -1e30


# ----------------------------------------------------------------------------- kernels

def project1_kernel(x_ref, w_ref, hones_ref, asrc_ref, adst_ref):
    """One MXU pass: [x|1] @ W1_aug -> [h1 | 1 | h1@a_src | h1@a_dst]; emit [h1|1] as bf16."""
    res = jnp.dot(x_ref[...], w_ref[...], preferred_element_type=jnp.float32)
    c = hones_ref.shape[1]                               # F1 + 1 (h1 columns + ones column)
    hones_ref[...] = res[:, :c].astype(jnp.bfloat16)     # bf16 at rest for the aggregation MXU
    asrc_ref[...] = res[:, c:c + 1]                      # (tm, 1) f32
    adst_ref[...] = res[:, c + 1:c + 2]                  # (tm, 1) f32


def _masked_softmax_num_den(adst_col, asrc_row, adj_i8, cols_bf16):
    """Dense masked GAT attention for one target-row tile.

    adst_col : (TM, 1) f32   target logits  a_dst . h_i
    asrc_row : (1, N)  f32   source logits  a_src . h_j  (transposed once in the wrapper)
    adj_i8   : (TM, N) int8  {0,1} adjacency (target, source), includes self loops
    cols_bf16: (N, C)  bf16  aggregation operand whose LAST column is all ones
    returns  : (TM, C) f32 = p @ cols  -> [numerators | softmax denominator] in one MXU pass
    """
    e = adst_col + asrc_row                              # (TM, N) raw logits
    e = jnp.where(e > 0, e, 0.2 * e)                     # LeakyReLU(negative_slope=0.2)
    e = jnp.where(adj_i8 != 0, e, NEG_INF)               # int8 mask -> additive -inf
    e = e - jnp.max(e, axis=-1, keepdims=True)           # self-loops guarantee a finite row max
    p = jnp.exp(e).astype(jnp.bfloat16)                  # non-edges underflow to exactly 0
    return jnp.dot(p, cols_bf16, preferred_element_type=jnp.float32)


def gat1_attn_project_kernel(hones_ref, asrc_ref, adj_ref, adst_ref, b1_ref, w2aug_ref,
                             h2g_ref, asrc2_ref, adst2_ref):
    """Layer-1 attention + bias + ReLU, fused with the layer-2 augmented projection."""
    f1 = hones_ref.shape[1] - 1
    h_out = h2g_ref.shape[1] - 1
    nd = _masked_softmax_num_den(adst_ref[...], asrc_ref[...], adj_ref[...], hones_ref[...])
    agg = nd[:, :f1] * pl.reciprocal(nd[:, f1:f1 + 1], approx=True)   # deferred normalization
    x2 = jnp.maximum(agg + b1_ref[...], 0.0)                          # GATConv bias + ReLU
    proj = jnp.dot(x2.astype(jnp.bfloat16), w2aug_ref[...],
                   preferred_element_type=jnp.float32)                # (TM, H+3)
    h2g_ref[...] = proj[:, :h_out + 1].astype(jnp.bfloat16)           # [h2pre | gate_pre] bf16
    asrc2_ref[...] = proj[:, h_out + 1:h_out + 2]
    adst2_ref[...] = proj[:, h_out + 2:h_out + 3]


def gat2_attn_kernel(h2cols_ref, asrc_ref, adj_ref, adst_ref, bias2_ref, h2_ref, gate_ref):
    """Layer-2 attention + bias; also emits the GlobalAttention gate logit (folded gate_w)."""
    h_out = h2_ref.shape[1]
    nd = _masked_softmax_num_den(adst_ref[...], asrc_ref[...], adj_ref[...], h2cols_ref[...])
    agg = nd[:, :h_out + 1] * pl.reciprocal(nd[:, h_out + 1:h_out + 2], approx=True)
    agg = agg + bias2_ref[...]                     # [b2 | b2@gate_w + gate_b]
    h2_ref[...] = agg[:, :h_out]                   # (TM, H) f32
    gate_ref[...] = agg[:, h_out:h_out + 1]        # (TM, 1) f32 gate logits


def pool_lin_kernel(h2_ref, gate_row_ref, bmask_bias_ref, lin_w_ref, lin_b_ref, out_ref):
    """GlobalAttention pooling + ReLU + (eval-mode dropout = identity) + Linear."""
    g = gate_row_ref[...] + bmask_bias_ref[...]    # (1, N) + (B, N) membership bias
    g = g - jnp.max(g, axis=-1, keepdims=True)     # every graph has >= 1 node
    p = jnp.exp(g)                                 # non-members underflow to exactly 0
    denom = jnp.sum(p, axis=-1, keepdims=True)
    pooled = jnp.dot(p, h2_ref[...], preferred_element_type=jnp.float32)     # (B, H)
    pooled = jnp.maximum(pooled * pl.reciprocal(denom), 0.0)  # exact reciprocal: only B rows
    # TODO(synk): F.dropout(p=0.5) is identity in eval mode (training=False); not emitted.
    out_ref[...] = (jnp.dot(pooled, lin_w_ref[...], preferred_element_type=jnp.float32)
                    + lin_b_ref[...])                                         # (B, L)


# ----------------------------------------------------------------------------- sizing helpers

_PHYS_VMEM_CACHE = None


def _physical_vmem_bytes():
    global _PHYS_VMEM_CACHE
    if _PHYS_VMEM_CACHE is None:
        try:
            v = int(pltpu.get_tpu_info().vmem_capacity_bytes)
            _PHYS_VMEM_CACHE = v if v > 0 else 64 * 1024 * 1024
        except Exception:
            _PHYS_VMEM_CACHE = 64 * 1024 * 1024      # conservative v7x floor
    return _PHYS_VMEM_CACHE


def _vmem_limit(est_bytes):
    # 2x headroom over the static working-set estimate, clamped inside physical VMEM
    # (v5e/v6e: 128 MiB -> bigger tiles allowed; v7x: 64 MiB).
    return int(min(max(2 * est_bytes, 8 * 1024 * 1024), int(0.85 * _physical_vmem_bytes())))


def _grid_params(est_bytes):
    return pltpu.CompilerParams(dimension_semantics=("parallel",),
                                vmem_limit_bytes=_vmem_limit(est_bytes))


def _pick_row_tile(n, res_cols):
    """Largest row tile whose attention working set fits the VMEM budget.

    Multiples of 32 keep the int8 adjacency tile on native (32, 128) sublane boundaries.
    Budget counts double-buffered streamed tiles, the double-buffered bf16 residents and
    ~3 live (tm, N) f32 temporaries (e / p / select intermediates)."""
    budget = int(0.55 * _physical_vmem_bytes())
    resident = 2 * (2 * n * res_cols + 4 * n)
    chosen = None
    for t in (512, 256, 128, 64, 32):
        if n % t:
            continue
        streamed = 2 * (t * n + 4 * t + 2 * t * (res_cols + 2) + 8 * t)
        temps = 3 * 4 * t * n
        if chosen is None:
            chosen = t
        if resident + streamed + temps <= budget:
            return t
    return chosen if chosen is not None else n


# ----------------------------------------------------------------------------- wrapper

def gat_net_forward(x, adj, bmask, params, *, row_tile=None):
    """adj is a dense (N, N) {0,1} mask (target, source) INCLUDING self loops; bmask is a
    (B, N) graph-membership mask. Every adj row / bmask row must be non-empty
    (add_self_loops invariant) or the masked softmax is 0/0."""
    f32, bf16 = jnp.float32, jnp.bfloat16
    n, f_in = x.shape
    b = bmask.shape[0]
    f1 = params["w1"].shape[1]
    h_dim = params["w2"].shape[1]
    l_dim = params["lin_w"].shape[1]

    res_cols = max(f1 + 1, h_dim + 2)
    tm = row_tile if row_tile is not None else _pick_row_tile(n, res_cols)
    assert n % tm == 0, "row_tile must divide N"
    grid = (n // tm,)

    # ---- one-time wrapper prep (O(N*F) XLA ops + a single O(N^2) int8 cast) ----
    # Layer 1: [x|1] @ W1_aug = [h1 | 1 | h1@a1_src | h1@a1_dst] in ONE MXU pass; the ones
    # column later provides the layer-1 softmax denominator straight from the MXU.
    x_aug = jnp.concatenate([x.astype(f32), jnp.ones((n, 1), f32)], axis=1)
    w1_top = jnp.concatenate(
        [params["w1"], jnp.zeros((f_in, 1), f32),
         params["w1"] @ params["a1_src"], params["w1"] @ params["a1_dst"]], axis=1)
    w1_pass = jnp.zeros((1, f1 + 3), f32).at[0, f1].set(1.0)
    w1_aug = jnp.concatenate([w1_top, w1_pass], axis=0)                       # (F_IN+1, F1+3)

    # Layer 2: [W2 | W2@gate_w | W2@a2_src | W2@a2_dst]; folding gate_w makes the pooling
    # gate logit fall out of the layer-2 aggregation for free.
    w2_aug = jnp.concatenate(
        [params["w2"], params["w2"] @ params["gate_w"],
         params["w2"] @ params["a2_src"], params["w2"] @ params["a2_dst"]], axis=1)  # (F1, H+3)
    bias2_aug = jnp.concatenate(
        [params["b2"], params["b2"] @ params["gate_w"] + params["gate_b"]], axis=1)  # (1, H+1)

    adj_i8 = adj.astype(jnp.int8)                                  # O(N^2) mask shipped as int8
    bmask_bias = (1.0 - bmask.astype(f32)) * NEG_INF               # (B, N) additive pool mask

    # 1) layer-1 fused projection -> [h1|1] (bf16 at rest), asrc1, adst1
    est_a = (2 * (2 * tm * (f_in + 1) + 2 * (f_in + 1) * (f1 + 3) + 2 * tm * (f1 + 1) + 8 * tm)
             + 4 * tm * (f1 + 3))
    h1ones, asrc1, adst1 = pl.pallas_call(
        project1_kernel,
        out_shape=(jax.ShapeDtypeStruct((n, f1 + 1), bf16),
                   jax.ShapeDtypeStruct((n, 1), f32),
                   jax.ShapeDtypeStruct((n, 1), f32)),
        grid=grid,
        in_specs=[pl.BlockSpec((tm, f_in + 1), lambda i: (i, 0)),
                  pl.BlockSpec((f_in + 1, f1 + 3), lambda i: (0, 0))],
        out_specs=(pl.BlockSpec((tm, f1 + 1), lambda i: (i, 0)),
                   pl.BlockSpec((tm, 1), lambda i: (i, 0)),
                   pl.BlockSpec((tm, 1), lambda i: (i, 0))),
        compiler_params=_grid_params(est_a),
    )(x_aug.astype(bf16), w1_aug.astype(bf16))
    asrc1_row = asrc1.T            # grid-invariant (1, N); transposed once, not per tile

    # 2) layer-1 attention (+b1, ReLU) fused with the layer-2 augmented projection
    est_b = (2 * (2 * n * (f1 + 1) + 4 * n)                        # double-buffered residents
             + 2 * (tm * n + 4 * tm + 2 * tm * (h_dim + 1) + 8 * tm)
             + 2 * (4 * f1 + 2 * f1 * (h_dim + 3))
             + 3 * 4 * tm * n)                                     # live f32 (tm, N) temporaries
    h2g, asrc2, adst2 = pl.pallas_call(
        gat1_attn_project_kernel,
        out_shape=(jax.ShapeDtypeStruct((n, h_dim + 1), bf16),
                   jax.ShapeDtypeStruct((n, 1), f32),
                   jax.ShapeDtypeStruct((n, 1), f32)),
        grid=grid,
        in_specs=[pl.BlockSpec((n, f1 + 1), lambda i: (0, 0)),     # resident bf16 [h1|1]
                  pl.BlockSpec((1, n), lambda i: (0, 0)),          # resident asrc1 row (f32)
                  pl.BlockSpec((tm, n), lambda i: (i, 0)),         # streamed int8 mask tile
                  pl.BlockSpec((tm, 1), lambda i: (i, 0)),         # adst1 tile
                  pl.BlockSpec((1, f1), lambda i: (0, 0)),         # b1
                  pl.BlockSpec((f1, h_dim + 3), lambda i: (0, 0))],  # W2_aug (bf16)
        out_specs=(pl.BlockSpec((tm, h_dim + 1), lambda i: (i, 0)),
                   pl.BlockSpec((tm, 1), lambda i: (i, 0)),
                   pl.BlockSpec((tm, 1), lambda i: (i, 0))),
        compiler_params=_grid_params(est_b),
    )(h1ones, asrc1_row, adj_i8, adst1, params["b1"].astype(f32), w2_aug.astype(bf16))
    asrc2_row = asrc2.T
    # append the ones column ONCE in XLA (O(N*H) bf16) -> layer-2 MXU denominator
    h2cols = jnp.concatenate([h2g, jnp.ones((n, 1), bf16)], axis=1)       # (N, H+2) bf16

    # 3) layer-2 attention (+b2) -> h2 and GlobalAttention gate logits
    est_c = (2 * (2 * n * (h_dim + 2) + 4 * n)
             + 2 * (tm * n + 4 * tm + 4 * tm * h_dim + 4 * tm)
             + 2 * 4 * (h_dim + 1)
             + 3 * 4 * tm * n)
    h2, gate = pl.pallas_call(
        gat2_attn_kernel,
        out_shape=(jax.ShapeDtypeStruct((n, h_dim), f32),
                   jax.ShapeDtypeStruct((n, 1), f32)),
        grid=grid,
        in_specs=[pl.BlockSpec((n, h_dim + 2), lambda i: (0, 0)),  # resident bf16 [h2pre|gate|1]
                  pl.BlockSpec((1, n), lambda i: (0, 0)),          # resident asrc2 row
                  pl.BlockSpec((tm, n), lambda i: (i, 0)),         # streamed int8 mask tile
                  pl.BlockSpec((tm, 1), lambda i: (i, 0)),         # adst2 tile
                  pl.BlockSpec((1, h_dim + 1), lambda i: (0, 0))],  # [b2 | b2@gate_w+gate_b]
        out_specs=(pl.BlockSpec((tm, h_dim), lambda i: (i, 0)),
                   pl.BlockSpec((tm, 1), lambda i: (i, 0))),
        compiler_params=_grid_params(est_c),
    )(h2cols, asrc2_row, adj_i8, adst2, bias2_aug.astype(f32))
    gate_row = gate.T

    # 4) GlobalAttention pooling + ReLU + Linear (pool is O(N*H); kept monolithic, see TODO)
    est_p = 4 * (n * h_dim + n + b * n + h_dim * l_dim + l_dim + b * l_dim + 2 * b * n)
    out = pl.pallas_call(
        pool_lin_kernel,
        out_shape=jax.ShapeDtypeStruct((b, l_dim), f32),
        in_specs=[pl.BlockSpec(memory_space=pltpu.MemorySpace.VMEM)] * 5,
        out_specs=pl.BlockSpec(memory_space=pltpu.MemorySpace.VMEM),
        compiler_params=pltpu.CompilerParams(vmem_limit_bytes=_vmem_limit(est_p)),
    )(h2, gate_row, bmask_bias, params["lin_w"].astype(f32), params["lin_b"].astype(f32))
    return out


# ----------------------------------------------------------------------------- reference

def _reference_forward(x, adj, bmask, p):
    """Pure-JAX f32 reference with the original module's math (eval mode)."""
    def gat(xx, w, a_s, a_d, bias):
        h = xx @ w
        e = (h @ a_d) + (h @ a_s).T
        e = jnp.where(e > 0, e, 0.2 * e)
        e = jnp.where(adj > 0, e, NEG_INF)
        e = e - jnp.max(e, axis=-1, keepdims=True)
        q = jnp.where(adj > 0, jnp.exp(e), 0.0)
        alpha = q / jnp.sum(q, axis=-1, keepdims=True)
        return alpha @ h + bias

    h1 = jnp.maximum(gat(x, p["w1"], p["a1_src"], p["a1_dst"], p["b1"]), 0.0)
    h2 = gat(h1, p["w2"], p["a2_src"], p["a2_dst"], p["b2"])
    gate = (h2 @ p["gate_w"] + p["gate_b"]).T
    gate = jnp.where(bmask > 0, gate, NEG_INF)
    gate = gate - jnp.max(gate, axis=-1, keepdims=True)
    q = jnp.where(bmask > 0, jnp.exp(gate), 0.0)
    attn = q / jnp.sum(q, axis=-1, keepdims=True)
    pooled = jnp.maximum(attn @ h2, 0.0)
    return pooled @ p["lin_w"] + p["lin_b"]


# ----------------------------------------------------------------------------- demo

if __name__ == "__main__":
    # num_node_features=8 -> conv1 out = 8//2 = 4; hidden_channels=32; num_label_features=4.
    # N=64 nodes, B=2 graphs of 32 nodes each (ring topology per graph), row_tile=32 -> grid=(2,).
    N, B = 64, 2
    F_IN, F1, H, L = 8, 4, 32, 4
    NODES_PER_GRAPH = N // B

    key = jax.random.PRNGKey(0)
    keys = jax.random.split(key, 12)

    def glorot(k, shape):
        fan_in, fan_out = shape[0], shape[-1]
        scale = (6.0 / (fan_in + fan_out)) ** 0.5
        return jax.random.uniform(k, shape, jnp.float32, -scale, scale)

    params = {
        "w1": glorot(keys[0], (F_IN, F1)),
        "a1_src": glorot(keys[1], (F1, 1)),
        "a1_dst": glorot(keys[2], (F1, 1)),
        "b1": jnp.zeros((1, F1), jnp.float32),
        "w2": glorot(keys[3], (F1, H)),
        "a2_src": glorot(keys[4], (H, 1)),
        "a2_dst": glorot(keys[5], (H, 1)),
        "b2": jnp.zeros((1, H), jnp.float32),
        "gate_w": glorot(keys[6], (H, 1)),
        "gate_b": jnp.zeros((1, 1), jnp.float32),
        "lin_w": glorot(keys[7], (H, L)),
        "lin_b": glorot(keys[8], (1, L)),
    }

    x = jax.random.normal(keys[9], (N, F_IN), jnp.float32)

    # Dense adjacency (target, source): bidirectional ring per graph + self loops (add_self_loops),
    # built block-diagonally with a Kronecker product.
    eye_g = jnp.eye(NODES_PER_GRAPH, dtype=jnp.float32)
    ring = eye_g + jnp.roll(eye_g, 1, axis=1) + jnp.roll(eye_g, -1, axis=1)
    adj = jnp.kron(jnp.eye(B, dtype=jnp.float32), ring)
    assert bool(jnp.all(jnp.diag(adj) == 1.0))          # self-loop invariant (softmax never 0/0)

    # Graph-membership mask (replaces the PyG `batch` vector).
    bmask = jnp.kron(jnp.eye(B, dtype=jnp.float32), jnp.ones((1, NODES_PER_GRAPH), jnp.float32))
    assert bool(jnp.all(jnp.sum(bmask, axis=-1) > 0))   # every graph has at least one node

    out = gat_net_forward(x, adj, bmask, params, row_tile=32)
    out = jax.block_until_ready(out)

    ref = _reference_forward(x, adj, bmask, params)
    assert out.shape == (B, L)
    assert bool(jnp.all(jnp.isfinite(out)))
    # bf16 projections / aggregation + approximate attention reciprocal vs an all-f32 reference.
    assert bool(jnp.allclose(out, ref, atol=5e-2, rtol=5e-2)), (
        f"max abs diff {float(jnp.max(jnp.abs(out - ref)))}")

    print("KERNEL_OK")
</pallas_src>

<mosaic_0001>
module attributes {stable_mosaic.version = 11 : i64} {
  func.func @project1_kernel(%arg0: i32, %arg1: memref<32x9xbf16, #tpu.memory_space<vmem>>, %arg2: memref<9x7xbf16, #tpu.memory_space<vmem>>, %arg3: memref<32x5xbf16, #tpu.memory_space<vmem>>, %arg4: memref<32x1xf32, #tpu.memory_space<vmem>>, %arg5: memref<32x1xf32, #tpu.memory_space<vmem>>) attributes {dimension_semantics = [#tpu.dimension_semantics<parallel>], iteration_bounds = array<i64: 2>, scalar_prefetch = 0 : i64, scratch_operands = 0 : i64, tpu.core_type = #tpu.core_type<tc>, window_params = [{transform_indices = @transform_0, window_bounds = array<i64: 32, 9>}, {pipeline_mode = #tpu.pipeline_mode<synchronous>, transform_indices = @transform_1, window_bounds = array<i64: 9, 7>}, {transform_indices = @transform_2, window_bounds = array<i64: 32, 5>}, {transform_indices = @transform_3, window_bounds = array<i64: 32, 1>}, {transform_indices = @transform_4, window_bounds = array<i64: 32, 1>}]} {
    %c0 = arith.constant 0 : index
    %c0_0 = arith.constant 0 : index
    %0 = vector.load %arg1[%c0, %c0_0] : memref<32x9xbf16, #tpu.memory_space<vmem>>, vector<32x9xbf16>
    %c0_1 = arith.constant 0 : index
    %c0_2 = arith.constant 0 : index
    %1 = vector.load %arg2[%c0_1, %c0_2] : memref<9x7xbf16, #tpu.memory_space<vmem>>, vector<9x7xbf16>
    %cst = arith.constant dense<0.000000e+00> : vector<32x7xf32>
    %2 = tpu.matmul %0, %1, %cst {dimension_numbers = #tpu.dot_dimension_numbers<[1], [0], [0], [1], [0, 0, 1, 1], [], []>} : vector<32x9xbf16>, vector<9x7xbf16>, vector<32x7xf32> -> vector<32x7xf32>
    %3 = vector.extract_strided_slice %2 {offsets = [0, 0], sizes = [32, 5], strides = [1, 1]} : vector<32x7xf32> to vector<32x5xf32>
    %4 = arith.truncf %3 : vector<32x5xf32> to vector<32x5xbf16>
    %c0_3 = arith.constant 0 : index
    %c0_4 = arith.constant 0 : index
    %5 = vector.load %arg3[%c0_3, %c0_4] : memref<32x5xbf16, #tpu.memory_space<vmem>>, vector<32x5xbf16>
    tpu.vector_store %arg3[%c0_3, %c0_4], %4 {strides = array<i32>} : memref<32x5xbf16, #tpu.memory_space<vmem>>, vector<32x5xbf16>,
    %6 = vector.extract_strided_slice %2 {offsets = [0, 5], sizes = [32, 1], strides = [1, 1]} : vector<32x7xf32> to vector<32x1xf32>
    %c0_5 = arith.constant 0 : index
    %c0_6 = arith.constant 0 : index
    %7 = vector.load %arg4[%c0_5, %c0_6] : memref<32x1xf32, #tpu.memory_space<vmem>>, vector<32x1xf32>
    tpu.vector_store %arg4[%c0_5, %c0_6], %6 {strides = array<i32>} : memref<32x1xf32, #tpu.memory_space<vmem>>, vector<32x1xf32>,
    %8 = vector.extract_strided_slice %2 {offsets = [0, 6], sizes = [32, 1], strides = [1, 1]} : vector<32x7xf32> to vector<32x1xf32>
    %c0_7 = arith.constant 0 : index
    %c0_8 = arith.constant 0 : index
    %9 = vector.load %arg5[%c0_7, %c0_8] : memref<32x1xf32, #tpu.memory_space<vmem>>, vector<32x1xf32>
    tpu.vector_store %arg5[%c0_7, %c0_8], %8 {strides = array<i32>} : memref<32x1xf32, #tpu.memory_space<vmem>>, vector<32x1xf32>,
    return
  }
  func.func @transform_0(%arg0: i32) -> (i32, i32) {
    %c0_i32 = arith.constant 0 : i32
    %c0_i32_0 = arith.constant 0 : i32
    return %arg0, %c0_i32 : i32, i32
  }
  func.func @transform_1(%arg0: i32) -> (i32, i32) {
    %c0_i32 = arith.constant 0 : i32
    %c0_i32_0 = arith.constant 0 : i32
    %c0_i32_1 = arith.constant 0 : i32
    return %c0_i32, %c0_i32_0 : i32, i32
  }
  func.func @transform_2(%arg0: i32) -> (i32, i32) {
    %c0_i32 = arith.constant 0 : i32
    %c0_i32_0 = arith.constant 0 : i32
    return %arg0, %c0_i32 : i32, i32
  }
  func.func @transform_3(%arg0: i32) -> (i32, i32) {
    %c0_i32 = arith.constant 0 : i32
    %c0_i32_0 = arith.constant 0 : i32
    return %arg0, %c0_i32 : i32, i32
  }
  func.func @transform_4(%arg0: i32) -> (i32, i32) {
    %c0_i32 = arith.constant 0 : i32
    %c0_i32_0 = arith.constant 0 : i32
    return %arg0, %c0_i32 : i32, i32
  }
}

</mosaic_0001>

<llo_original>
// kernel: tpu_custom_call.1
$region0: #{tpu_custom_call.1}
  #allocation0 [shape = 'u32[]', space=smem, size = 0x4, offset = 0x4, fixed_abs, tag = 'smem constant byte address 0x4 - core index']
  #allocation1 [shape = 'u32[72,128]{1,0:T(1,128)}', space=vmem, size = 0x9000, scoped, tag = 'internal scratch']
  %s0 = inlined_call_operand.vmem [shape: bf16[64,9], index: 0, kind: input, shape index: {}]
  %s1 = inlined_call_operand.vmem [shape: bf16[9,7], index: 1, kind: input, shape index: {}]
  %s2 = inlined_call_operand.vmem [shape: bf16[64,5], index: 2, kind: output, shape index: {0}]
  %s3 = inlined_call_operand.vmem [shape: f32[64,1], index: 3, kind: output, shape index: {1}]
  %s4 = inlined_call_operand.vmem [shape: f32[64,1], index: 4, kind: output, shape index: {2}]
  %5 = xla_tuple %s2, %s3, %s4
  %s6 = sld [smem:[#allocation0]]
  $region57: #{tpu_custom_call.1} parent=0
    _
  %s8 = ssub.s32 1, %s6
  %s9 = scalar_select 0, %s8, %s6
  loop: start=0, step=1, limit=4
  $region2: #{tpu_custom_call.1} parent=0 // loop_pre_header
    _
  $region3: #{tpu_custom_call.1} parent=0 // loop_header
    %s11 = sphi 0, %s15
    %p12 = scmp.ge.s32.totalorder %s11, 4
    %s21 = sphi 0, %s23
    %s24 = sphi 0, %s21
    %s25 = sphi 0, %s24
    %s41 = sphi 0, %s25
    %s45 = sphi 0, %s45
    %s47 = sphi 0, %s45
    %s48 = sphi 0, %s47
    %s62 = sphi 0, %s48
    %s68 = sphi 0, %s70
    %s71 = sphi 0, %s68
    %s72 = sphi 0, %s71
    %s88 = sphi 0, %s72
    %s94 = sphi 0, %s96
    %s97 = sphi 0, %s94
    %s98 = sphi 0, %s97
    %s114 = sphi 0, %s98
    %s120 = sphi 0, %s122
    %s123 = sphi 0, %s120
    %s124 = sphi 0, %s123
    %s140 = sphi 0, %s124
  $region4: #{tpu_custom_call.1} parent=0 // loop_header_branch
    %14 = sbr.rel (%p12) target = $region8
  $region5: #{tpu_custom_call.1} parent=0 // loop_body
    %s16 = ssub.s32 %s11, 1
    %s17 = ssub.s32 %s11, 2
    %s18 = sadd.s32 %s11, 1
    %s19 = ssub.s32 %s11, %s18
    %p20 = scmp.eq.s32.totalorder %s19, 0
    %s22 = sadd.s32 %s21, 1
    %s23 = scalar_select %p20, %s21, %s22
    %p26 = pneg %p20
    %p27 = scmp.eq.s32.totalorder %s11, 1
    %p28 = por %p26, %p27
    %p29 = scmp.ne.s32.totalorder %s21, %s24
    %p30 = scmp.eq.s32.totalorder %s11, 0
    %p31 = por %p29, %p30
    %p32 = scmp.ne.s32.totalorder %s21, %s24
    %p33 = scmp.eq.s32.totalorder %s16, 1
    %p34 = por %p32, %p33
    %p35 = scmp.ne.s32.totalorder %s24, %s25
    %p36 = scmp.eq.s32.totalorder %s16, 0
    %p37 = por %p35, %p36
    %p38 = scmp.ne.s32.totalorder %s24, %s25
    %p39 = scmp.eq.s32.totalorder %s17, 1
    %p40 = por %p38, %p39
    %p42 = scmp.ne.s32.totalorder %s25, %s41
    %p43 = scmp.eq.s32.totalorder %s17, 0
    %p44 = por %p42, %p43
    %s46 = sadd.s32 %s45, 1
    %p49 = scmp.eq.s32.totalorder %s11, 1
    %p50 = scmp.ne.s32.totalorder %s45, %s47
    %p51 = scmp.eq.s32.totalorder %s11, 0
    %p52 = por %p50, %p51
    %p53 = scmp.ne.s32.totalorder %s45, %s47
    %p54 = scmp.eq.s32.totalorder %s16, 1
    %p55 = por %p53, %p54
    %p56 = scmp.ne.s32.totalorder %s47, %s48
    %p57 = scmp.eq.s32.totalorder %s16, 0
    %p58 = por %p56, %p57
    %p59 = scmp.ne.s32.totalorder %s47, %s48
    %p60 = scmp.eq.s32.totalorder %s17, 1
    %p61 = por %p59, %p60
    %p63 = scmp.ne.s32.totalorder %s48, %s62
    %p64 = scmp.eq.s32.totalorder %s17, 0
    %p65 = por %p63, %p64
    %s66 = ssub.s32 %s11, %s18
    %p67 = scmp.eq.s32.totalorder %s66, 0
    %s69 = sadd.s32 %s68, 1
    %s70 = scalar_select %p67, %s68, %s69
    %p73 = pneg %p67
    %p74 = scmp.eq.s32.totalorder %s11, 1
    %p75 = por %p73, %p74
    %p76 = scmp.ne.s32.totalorder %s68, %s71
    %p77 = scmp.eq.s32.totalorder %s11, 0
    %p78 = por %p76, %p77
    %p79 = scmp.ne.s32.totalorder %s68, %s71
    %p80 = scmp.eq.s32.totalorder %s16, 1
    %p81 = por %p79, %p80
    %p82 = scmp.ne.s32.totalorder %s71, %s72
    %p83 = scmp.eq.s32.totalorder %s16, 0
    %p84 = por %p82, %p83
    %p85 = scmp.ne.s32.totalorder %s71, %s72
    %p86 = scmp.eq.s32.totalorder %s17, 1
    %p87 = por %p85, %p86
    %p89 = scmp.ne.s32.totalorder %s72, %s88
    %p90 = scmp.eq.s32.totalorder %s17, 0
    %p91 = por %p89, %p90
    %s92 = ssub.s32 %s11, %s18
    %p93 = scmp.eq.s32.totalorder %s92, 0
    %s95 = sadd.s32 %s94, 1
    %s96 = scalar_select %p93, %s94, %s95
    %p99 = pneg %p93
    %p100 = scmp.eq.s32.totalorder %s11, 1
    %p101 = por %p99, %p100
    %p102 = scmp.ne.s32.totalorder %s94, %s97
    %p103 = scmp.eq.s32.totalorder %s11, 0
    %p104 = por %p102, %p103
    %p105 = scmp.ne.s32.totalorder %s94, %s97
    %p106 = scmp.eq.s32.totalorder %s16, 1
    %p107 = por %p105, %p106
    %p108 = scmp.ne.s32.totalorder %s97, %s98
    %p109 = scmp.eq.s32.totalorder %s16, 0
    %p110 = por %p108, %p109
    %p111 = scmp.ne.s32.totalorder %s97, %s98
    %p112 = scmp.eq.s32.totalorder %s17, 1
    %p113 = por %p111, %p112
    %p115 = scmp.ne.s32.totalorder %s98, %s114
    %p116 = scmp.eq.s32.totalorder %s17, 0
    %p117 = por %p115, %p116
    %s118 = ssub.s32 %s11, %s18
    %p119 = scmp.eq.s32.totalorder %s118, 0
    %s121 = sadd.s32 %s120, 1
    %s122 = scalar_select %p119, %s120, %s121
    %p125 = pneg %p119
    %p126 = scmp.eq.s32.totalorder %s11, 1
    %p127 = por %p125, %p126
    %p128 = scmp.ne.s32.totalorder %s120, %s123
    %p129 = scmp.eq.s32.totalorder %s11, 0
    %p130 = por %p128, %p129
    %p131 = scmp.ne.s32.totalorder %s120, %s123
    %p132 = scmp.eq.s32.totalorder %s16, 1
    %p133 = por %p131, %p132
    %p134 = scmp.ne.s32.totalorder %s123, %s124
    %p135 = scmp.eq.s32.totalorder %s16, 0
    %p136 = por %p134, %p135
    %p137 = scmp.ne.s32.totalorder %s123, %s124
    %p138 = scmp.eq.s32.totalorder %s17, 1
    %p139 = por %p137, %p138
    %p141 = scmp.ne.s32.totalorder %s124, %s140
    %p142 = scmp.eq.s32.totalorder %s17, 0
    %p143 = por %p141, %p142
    %p144 = scmp.le.s32.totalorder 1, %s11
    %p145 = scmp.lt.s32.totalorder %s11, 3
    %p146 = pnand %p144, %p145
    %p147 = pneg %p146
    // Predicated region
    $region9: #{tpu_custom_call.1} parent=5 // pred_check
      _
    $region10: #{tpu_custom_call.1} parent=5 // pred_check_branch
      %149 = sbr.rel (%p146) target = $region12
    $region11: #{tpu_custom_call.1} parent=5 // pred_region
      %s150 = ssub.s32 %s11, 1
      // Predicated region
      $region13: #{tpu_custom_call.1} parent=11 // pred_check
        %p151 = pneg %p58
      $region14: #{tpu_custom_call.1} parent=11 // pred_check_branch
        %153 = sbr.rel (%p151) target = $region16
      $region15: #{tpu_custom_call.1} parent=11 // pred_region
        _
      $region16: #{tpu_custom_call.1} parent=11 // pred_fallthru
        _
    $region12: #{tpu_custom_call.1} parent=5 // pred_fallthru
      _
    %p154 = scmp.lt.s32.totalorder %s11, 2
    // Predicated region
    $region17: #{tpu_custom_call.1} parent=5 // pred_check
      %p155 = pneg %p154
    $region18: #{tpu_custom_call.1} parent=5 // pred_check_branch
      %157 = sbr.rel (%p155) target = $region20
    $region19: #{tpu_custom_call.1} parent=5 // pred_region
      // Predicated region
      $region21: #{tpu_custom_call.1} parent=19 // pred_check
        %p158 = pneg %p31
      $region22: #{tpu_custom_call.1} parent=19 // pred_check_branch
        %160 = sbr.rel (%p158) target = $region24
      $region23: #{tpu_custom_call.1} parent=19 // pred_region
        %s161 = smul.u32 4, %s11
        %p162 = scmp.lt.s32.totalorder %s161, 7
        %s163 = scalar_select %p162, %s161, 7
        %s164 = smul.addr %s163, 4
        %s165 = scalar_lea.vmem %s0, %s164
        %s166 = smul.u32 4, %s11
      $region24: #{tpu_custom_call.1} parent=19 // pred_fallthru
        _
    $region20: #{tpu_custom_call.1} parent=5 // pred_fallthru
      _
    %p167 = scmp.le.s32.totalorder 1, %s11
    %p168 = scmp.lt.s32.totalorder %s11, 3
    %p169 = pnand %p167, %p168
    %p170 = pneg %p169
    // Predicated region
    $region25: #{tpu_custom_call.1} parent=5 // pred_check
      _
    $region26: #{tpu_custom_call.1} parent=5 // pred_check_branch
      %172 = sbr.rel (%p169) target = $region28
    $region27: #{tpu_custom_call.1} parent=5 // pred_region
      %s173 = ssub.s32 %s11, 1
      %s174 = smul.u32 4, %s16
      %p175 = scmp.lt.s32.totalorder %s174, 7
      %s176 = scalar_select %p175, %s174, 7
      %s177 = smul.addr %s176, 4
      %s178 = scalar_lea.vmem %s0, %s177
      %p179 = pneg %p37
      %p180 = pneg %p34
      %p181 = pneg %p58
      %p182 = pneg %p55
      %p183 = pneg %p84
      %p184 = pneg %p81
      %s185 = smul.u32 4, %s16
      %p186 = scmp.lt.s32.totalorder %s185, 7
      %s187 = scalar_select %p186, %s185, 7
      %s188 = smul.addr %s187, 4
      %s189 = scalar_lea.vmem %s2, %s188
      %p190 = pneg %p110
      %p191 = pneg %p107
      %s192 = smul.u32 4, %s16
      %p193 = scmp.lt.s32.totalorder %s192, 7
      %s194 = scalar_select %p193, %s192, 7
      %s195 = smul.addr %s194, 8
      %s196 = scalar_lea.vmem %s3, %s195
      %p197 = pneg %p136
      %p198 = pneg %p133
      %s199 = smul.u32 4, %s16
      %p200 = scmp.lt.s32.totalorder %s199, 7
      %s201 = scalar_select %p200, %s199, 7
      %s202 = smul.addr %s201, 8
      %s203 = scalar_lea.vmem %s4, %s202
      %s204 = smul.u32 4, %s16
      %p205 = scmp.lt.s32.totalorder %s204, 7
      %s206 = scalar_select %p205, %s204, 7
      %s207 = smul.addr %s206, 4
      %s208 = scalar_lea.vmem %s0, %s207
      %s209 = smul.u32 4, %s16
      %s210 = smul.u32 4, %s16
      %p211 = scmp.lt.s32.totalorder %s210, 7
      %s212 = scalar_select %p211, %s210, 7
      %s213 = smul.addr %s212, 4
      %s214 = scalar_lea.vmem %s2, %s213
      %s215 = smul.u32 4, %s16
      %s216 = smul.u32 4, %s16
      %p217 = scmp.lt.s32.totalorder %s216, 7
      %s218 = scalar_select %p217, %s216, 7
      %s219 = smul.addr %s218, 8
      %s220 = scalar_lea.vmem %s3, %s219
      %s221 = smul.u32 4, %s16
      %s222 = smul.u32 4, %s16
      %p223 = scmp.lt.s32.totalorder %s222, 7
      %s224 = scalar_select %p223, %s222, 7
      %s225 = smul.addr %s224, 8
      %s226 = scalar_lea.vmem %s4, %s225
      %s227 = smul.u32 4, %s16
      %v229 = vld [vmem:[%s208] sm:$0xf]
      %v230 = vld [vmem:[%s208 + $0x4] sm:$0xf]
      %v231 = vld [vmem:[%s208 + $0x8] sm:$0xf]
      %v232 = vld [vmem:[%s208 + $0xc] sm:$0xf]
      %v233 = vld [vmem:[%s1] sm:$0xf]
      %v234 = vld [vmem:[%s1 + $0x4] sm:$0x1]
      %v239 = vunpack.c.l.b16 %v229
      %v240 = vunpack.c.l.b16 %v230
      %v241 = vunpack.c.l.b16 %v231
      %v242 = vunpack.c.l.b16 %v232
      %v243 = vpack.c.b16 %v240, %v239
      %v244 = vpack.c.b16 %v242, %v241
      %v247 = vunpack.c.l.b16 %v233
      %v248 = vunpack.c.l.b16 %v234
      %v249 = vpack.c.b16 %v248, %v247
      %vm250 = vcmask 72704
      %v252 = vsel %vm250, %v243, 0
      %v255 = vsel %vm250, %v244, 0
      %vm257 = vcmask 1043456
      %vm258 = vcmask 1044480
      %v259 = vsel %vm257, 4294967295, 65535
      %v260 = vsel %vm258, %v259, 0
      %v262 = vand.u32 %v249, %v260
      %264 = vmatpush.bf16.msra.mxu0 0
      %265 = vmatpush.bf16.msra.mxu0 0
      %266 = vmatpush.bf16.msra.mxu0 0
      %267 = vmatpush.bf16.msra.mxu0 0
      %268 = vmatpush.bf16.msra.mxu0 0
      %269 = vmatpush.bf16.msra.mxu0 0
      %270 = vmatpush.bf16.msra.mxu0 0
      %271 = vmatpush.bf16.msra.mxu0 %v262
      %272 = vmatmul.bf16.gmra.mxu0 %v252
      %v273 = vpop.f32.mrf.mxu0
      %v274 = vadd.f32 0.0, %v273
      %v275 = vpop.f32.mrf.mxu0
      %v276 = vadd.f32 0.0, %v275
      %277 = vmatmul.bf16.gmra.mxu0 %v255
      %v278 = vpop.f32.mrf.mxu0
      %v279 = vadd.f32 0.0, %v278
      %v280 = vpop.f32.mrf.mxu0
      %v281 = vadd.f32 0.0, %v280
      %282 = vdwg.mxu0
      %v283 = vpack.c.bf16 %v274, %v274
      %v284 = vpack.c.bf16 %v276, %v276
      %v285 = vpack.c.bf16 %v279, %v279
      %v286 = vpack.c.bf16 %v281, %v281
      %vm287 = vcmask 35840
      %288 = vst.msk [vmem:[%s214] sm:$0xf] %vm287, %v283
      %289 = vst.msk [vmem:[%s214 + $0x4] sm:$0xf] %vm287, %v284
      %290 = vst.msk [vmem:[%s214 + $0x8] sm:$0xf] %vm287, %v285
      %291 = vst.msk [vmem:[%s214 + $0xc] sm:$0xf] %vm287, %v286
      %296 = vrot.lane.b32.xlu0 %v274, 123
      %v297 = vpop.permute.xlu0 %296
      %298 = vrot.lane.b32.xlu0 %v276, 123
      %v299 = vpop.permute.xlu0 %298
      %300 = vrot.lane.b32.xlu0 %v279, 123
      %v301 = vpop.permute.xlu0 %300
      %302 = vrot.lane.b32.xlu0 %v281, 123
      %v303 = vpop.permute.xlu0 %302
      %vm308 = vcmask 7168
      %309 = vst.msk [vmem:[%s220] sm:$0xff] %vm308, %v297
      %310 = vst.msk [vmem:[%s220 + $0x8] sm:$0xff] %vm308, %v299
      %311 = vst.msk [vmem:[%s220 + $0x10] sm:$0xff] %vm308, %v301
      %312 = vst.msk [vmem:[%s220 + $0x18] sm:$0xff] %vm308, %v303
      %313 = vrot.lane.b32.xlu0 %v274, 122
      %v314 = vpop.permute.xlu0 %313
      %315 = vrot.lane.b32.xlu0 %v276, 122
      %v316 = vpop.permute.xlu0 %315
      %317 = vrot.lane.b32.xlu0 %v279, 122
      %v318 = vpop.permute.xlu0 %317
      %319 = vrot.lane.b32.xlu0 %v281, 122
      %v320 = vpop.permute.xlu0 %319
      %325 = vst.msk [vmem:[%s226] sm:$0xff] %vm308, %v314
      %326 = vst.msk [vmem:[%s226 + $0x8] sm:$0xff] %vm308, %v316
      %327 = vst.msk [vmem:[%s226 + $0x10] sm:$0xff] %vm308, %v318
      %328 = vst.msk [vmem:[%s226 + $0x18] sm:$0xff] %vm308, %v320
      %s329 = smul.u32 4, %s16
      %p330 = scmp.lt.s32.totalorder %s329, 7
      %s331 = scalar_select %p330, %s329, 7
      %s332 = smul.addr %s331, 4
      %s333 = scalar_lea.vmem %s2, %s332
      %s334 = smul.u32 4, %s16
      %p335 = scmp.lt.s32.totalorder %s334, 7
      %s336 = scalar_select %p335, %s334, 7
      %s337 = smul.addr %s336, 8
      %s338 = scalar_lea.vmem %s3, %s337
      %s339 = smul.u32 4, %s16
      %p340 = scmp.lt.s32.totalorder %s339, 7
      %s341 = scalar_select %p340, %s339, 7
      %s342 = smul.addr %s341, 8
      %s343 = scalar_lea.vmem %s4, %s342
      // Predicated region
      $region29: #{tpu_custom_call.1} parent=27 // pred_check
        %p344 = pneg %p81
      $region30: #{tpu_custom_call.1} parent=27 // pred_check_branch
        %346 = sbr.rel (%p344) target = $region32
      $region31: #{tpu_custom_call.1} parent=27 // pred_region
        %s347 = smul.u32 4, %s16
      $region32: #{tpu_custom_call.1} parent=27 // pred_fallthru
        _
      // Predicated region
      $region33: #{tpu_custom_call.1} parent=27 // pred_check
        %p348 = pneg %p107
      $region34: #{tpu_custom_call.1} parent=27 // pred_check_branch
        %350 = sbr.rel (%p348) target = $region36
      $region35: #{tpu_custom_call.1} parent=27 // pred_region
        %s351 = smul.u32 4, %s16
      $region36: #{tpu_custom_call.1} parent=27 // pred_fallthru
        _
      // Predicated region
      $region37: #{tpu_custom_call.1} parent=27 // pred_check
        %p352 = pneg %p133
      $region38: #{tpu_custom_call.1} parent=27 // pred_check_branch
        %354 = sbr.rel (%p352) target = $region40
      $region39: #{tpu_custom_call.1} parent=27 // pred_region
        %s355 = smul.u32 4, %s16
      $region40: #{tpu_custom_call.1} parent=27 // pred_fallthru
        _
    $region28: #{tpu_custom_call.1} parent=5 // pred_fallthru
      _
    %p356 = scmp.le.s32.totalorder 2, %s11
    // Predicated region
    $region41: #{tpu_custom_call.1} parent=5 // pred_check
      %p357 = pneg %p356
    $region42: #{tpu_custom_call.1} parent=5 // pred_check_branch
      %359 = sbr.rel (%p357) target = $region44
    $region43: #{tpu_custom_call.1} parent=5 // pred_region
      %s360 = ssub.s32 %s11, 2
      // Predicated region
      $region45: #{tpu_custom_call.1} parent=43 // pred_check
        %p361 = pneg %p87
      $region46: #{tpu_custom_call.1} parent=43 // pred_check_branch
        %363 = sbr.rel (%p361) target = $region48
      $region47: #{tpu_custom_call.1} parent=43 // pred_region
        %s364 = smul.u32 4, %s17
        %p365 = scmp.lt.s32.totalorder %s364, 7
        %s366 = scalar_select %p365, %s364, 7
        %s367 = smul.addr %s366, 4
        %s368 = scalar_lea.vmem %s2, %s367
      $region48: #{tpu_custom_call.1} parent=43 // pred_fallthru
        _
      // Predicated region
      $region49: #{tpu_custom_call.1} parent=43 // pred_check
        %p369 = pneg %p113
      $region50: #{tpu_custom_call.1} parent=43 // pred_check_branch
        %371 = sbr.rel (%p369) target = $region52
      $region51: #{tpu_custom_call.1} parent=43 // pred_region
        %s372 = smul.u32 4, %s17
        %p373 = scmp.lt.s32.totalorder %s372, 7
        %s374 = scalar_select %p373, %s372, 7
        %s375 = smul.addr %s374, 8
        %s376 = scalar_lea.vmem %s3, %s375
      $region52: #{tpu_custom_call.1} parent=43 // pred_fallthru
        _
      // Predicated region
      $region53: #{tpu_custom_call.1} parent=43 // pred_check
        %p377 = pneg %p139
      $region54: #{tpu_custom_call.1} parent=43 // pred_check_branch
        %379 = sbr.rel (%p377) target = $region56
      $region55: #{tpu_custom_call.1} parent=43 // pred_region
        %s380 = smul.u32 4, %s17
        %p381 = scmp.lt.s32.totalorder %s380, 7
        %s382 = scalar_select %p381, %s380, 7
        %s383 = smul.addr %s382, 8
        %s384 = scalar_lea.vmem %s4, %s383
      $region56: #{tpu_custom_call.1} parent=43 // pred_fallthru
        _
    $region44: #{tpu_custom_call.1} parent=5 // pred_fallthru
      _
  $region6: #{tpu_custom_call.1} parent=0 // loop_footer
    %s15 = sadd.s32 1, %s11
  $region7: #{tpu_custom_call.1} parent=0 // loop_footer_branch
    %10 = sbr.rel target = $region3
  $region8: #{tpu_custom_call.1} parent=0 // loop_exit
    _

</llo_original>
